<compile_context>
chip_gen: v6e
topology: v6e:2x2x1
jax: 0.10.0
libtpu: 0.0.40
codegen_flags: <defaults>
</compile_context>

<pallas_src>
import functools

import jax
import jax.numpy as jnp
from jax.experimental import pallas as pl
from jax.experimental.pallas import tpu as pltpu

_SUBLANE = 16          # bf16 sublane packing -> batch-tile granularity
_HEADROOM = 4 << 20    # Mosaic internal-scratch headroom


def _round_up(n, m):
    return (n + m - 1) // m * m


def _ceil_div(a, b):
    return -(-a // b)


# ----------------------------------------------------------------------------
# Fused 3-layer kernel (weights resident in VMEM, batch-tiled grid).
# ----------------------------------------------------------------------------
def _fused_mlp_kernel(x_ref, w1_ref, b1_ref, w2_ref, b2_ref, w3_ref, b3_ref,
                      o_ref):
    x = x_ref[...]                                            # bf16 (tb, io_p)
    h1 = jnp.dot(x, w1_ref[...], preferred_element_type=jnp.float32) + b1_ref[...]
    h1 = jnp.maximum(h1, 0.0).astype(jnp.bfloat16)
    h2 = jnp.dot(h1, w2_ref[...], preferred_element_type=jnp.float32) + b2_ref[...]
    h2 = jnp.maximum(h2, 0.0).astype(jnp.bfloat16)
    y = jnp.dot(h2, w3_ref[...], preferred_element_type=jnp.float32) + b3_ref[...]
    o_ref[...] = y.astype(o_ref.dtype)


# ----------------------------------------------------------------------------
# Streaming (per-layer) fallback kernel for weights that don't fit VMEM.
# ----------------------------------------------------------------------------
def _linear_kernel(x_ref, w_ref, b_ref, o_ref, acc_ref, *, relu):
    k = pl.program_id(2)

    @pl.when(k == 0)
    def _():
        acc_ref[...] = jnp.zeros_like(acc_ref)

    acc_ref[...] += jnp.dot(x_ref[...], w_ref[...],
                            preferred_element_type=jnp.float32)

    @pl.when(k == pl.num_programs(2) - 1)
    def _():
        y = acc_ref[...] + b_ref[...]
        if relu:
            y = jnp.maximum(y, 0.0)
        o_ref[...] = y.astype(o_ref.dtype)


def _linear_pallas(x, w, b, *, relu, out_dtype, usable_vmem):
    """Streaming Linear(+ReLU): x (M,K) bf16, w (K,N) bf16, b (1,N) f32.

    M is a multiple of the chosen tm; K, N are multiples of 128.
    """
    M, K = x.shape
    _, N = w.shape
    tm = min(M, 256)
    tn = 512 if N % 512 == 0 else (256 if N % 256 == 0 else 128)
    tk = 512 if K % 512 == 0 else (256 if K % 256 == 0 else 128)
    grid = (M // tm, N // tn, K // tk)
    est = (2 * (tm * tk * 2 + tk * tn * 2 + tn * 4 + tm * tn * 4)
           + tm * tn * 4 + _HEADROOM)
    vmem_limit = int(min(usable_vmem, max(est, 32 * 1024 * 1024)))
    return pl.pallas_call(
        functools.partial(_linear_kernel, relu=relu),
        out_shape=jax.ShapeDtypeStruct((M, N), out_dtype),
        grid_spec=pltpu.PrefetchScalarGridSpec(
            num_scalar_prefetch=0,
            grid=grid,
            in_specs=[
                pl.BlockSpec((tm, tk), lambda i, j, k: (i, k)),
                pl.BlockSpec((tk, tn), lambda i, j, k: (k, j)),
                pl.BlockSpec((1, tn), lambda i, j, k: (0, j)),
            ],
            out_specs=pl.BlockSpec((tm, tn), lambda i, j, k: (i, j)),
            scratch_shapes=[pltpu.VMEM((tm, tn), jnp.float32)],
        ),
        compiler_params=pltpu.CompilerParams(
            dimension_semantics=("parallel", "parallel", "arbitrary"),
            vmem_limit_bytes=vmem_limit),
    )(x, w, b)


# ----------------------------------------------------------------------------
# Hardware-aware policy helpers.
# ----------------------------------------------------------------------------
def _device_kind():
    try:
        return jax.devices()[0].device_kind.lower()
    except Exception:
        return ""


def _vmem_capacity_bytes():
    try:
        cap = int(getattr(pltpu.get_tpu_info(), "vmem_capacity_bytes", 0))
        if cap > 0:
            return cap
    except Exception:
        pass
    # Heuristic fallback: v7x has 64 MiB per TensorCore, older chips 128 MiB.
    if "7" in _device_kind():
        return 64 * 1024 * 1024
    return 128 * 1024 * 1024


def _is_multi_tensorcore():
    kind = _device_kind().replace(" ", "")
    single_tc = ("v5e", "v5lite", "v6e", "v6lite", "v2", "v3")
    return not any(m in kind for m in single_tc)


def _fused_vmem_bytes(tb, io_p, h_p):
    # Grid-invariant weights/biases: constant index_map means no re-DMA, but
    # default pipelining still allocates two buffers each -> count x2.
    weights = 2 * 2 * (io_p * h_p + h_p * h_p + h_p * io_p)      # bf16
    biases = 2 * 4 * (2 * h_p + io_p)                            # f32
    x_tile = 2 * tb * io_p * 2                                   # bf16, dbl-buffered
    o_tile = 2 * tb * io_p * 4                                   # f32, dbl-buffered
    interm = tb * (16 * h_p + 4 * io_p)    # h1/h2 (f32 + bf16) + y (f32)
    return weights + biases + x_tile + o_tile + interm


def _choose_tb(B, io_p, h_p, usable_vmem, multi_tc):
    """Pick the batch tile (multiple of 16); None => weights don't fit VMEM."""
    per_row = 2 * io_p * 2 + 2 * io_p * 4 + 16 * h_p + 4 * io_p
    fixed = _fused_vmem_bytes(0, io_p, h_p)            # resident weights/biases
    avail = usable_vmem - fixed - _HEADROOM
    if avail <= 0:
        return None
    max_tb = (avail // per_row // _SUBLANE) * _SUBLANE
    if max_tb < _SUBLANE:
        return None
    b16 = _round_up(max(B, 1), _SUBLANE)
    if multi_tc:
        # The "parallel" grid axis is split across 2 TensorCores: keep >=4
        # grid steps (>=2 per core) when the batch allows so DMA stays
        # pipelined on each core.
        tb = min(max_tb, 512, b16)
        if b16 >= 4 * _SUBLANE and _ceil_div(b16, tb) < 4:
            tb = max(_SUBLANE, _round_up(_ceil_div(b16, 4), _SUBLANE))
    else:
        # Single TensorCore: extra grid steps only shrink the MXU M dim and
        # add per-step overhead, so take the largest tile that fits (grid=1 OK).
        tb = min(max_tb, 1024, b16)
    return min(tb, max_tb)


def _build_fused_call(b_pad, io_p, h_p, tb, out_dtype, usable_vmem):
    grid = (b_pad // tb,)

    def const(shape):
        # Grid-invariant operand: constant index_map -> no re-DMA between steps.
        return pl.BlockSpec(shape, lambda i: (0, 0))

    flops = 2 * b_pad * (io_p * h_p + h_p * h_p + h_p * io_p)
    bytes_accessed = (
        b_pad * io_p * 2                               # x (bf16)
        + 2 * (io_p * h_p + h_p * h_p + h_p * io_p)    # bf16 weights
        + 4 * (2 * h_p + io_p)                         # f32 biases
        + b_pad * io_p * 4)                            # f32 output
    vmem_limit = int(min(usable_vmem,
                         max(_fused_vmem_bytes(tb, io_p, h_p) + _HEADROOM,
                             16 * 1024 * 1024)))

    return pl.pallas_call(
        _fused_mlp_kernel,
        out_shape=jax.ShapeDtypeStruct((b_pad, io_p), out_dtype),
        grid_spec=pltpu.PrefetchScalarGridSpec(
            num_scalar_prefetch=0,
            grid=grid,
            in_specs=[
                pl.BlockSpec((tb, io_p), lambda i: (i, 0)),   # x tile (bf16)
                const((io_p, h_p)),                           # w1 (bf16)
                const((1, h_p)),                              # b1 (f32)
                const((h_p, h_p)),                            # w2 (bf16)
                const((1, h_p)),                              # b2 (f32)
                const((h_p, io_p)),                           # w3 (bf16)
                const((1, io_p)),                             # b3 (f32)
            ],
            out_specs=pl.BlockSpec((tb, io_p), lambda i: (i, 0)),
        ),
        compiler_params=pltpu.CompilerParams(
            dimension_semantics=("parallel",),
            vmem_limit_bytes=vmem_limit),
        cost_estimate=pl.CostEstimate(
            flops=flops, transcendentals=0, bytes_accessed=bytes_accessed),
    )


# ----------------------------------------------------------------------------
# Public wrapper.
# ----------------------------------------------------------------------------
def unconditioned_simple_mlp(x, params, *, tb=None):
    """Forward pass of Unconditioned_Simple_MLP.

    x: (B, io_dim) float32.
    params: dict of w1 (io,h), b1 (1,h), w2 (h,h), b2 (1,h), w3 (h,io),
            b3 (1,io), all float32 with weights stored (in_features, out).
    """
    B, io_dim = x.shape
    hidden = params["w1"].shape[1]

    io_p = _round_up(io_dim, 128)
    h_p = _round_up(hidden, 128)

    usable_vmem = int(_vmem_capacity_bytes() * 0.85)
    multi_tc = _is_multi_tensorcore()

    if tb is None:
        tb = _choose_tb(B, io_p, h_p, usable_vmem, multi_tc)
    else:
        tb = _round_up(int(tb), _SUBLANE)

    # Zero padding keeps padded lanes inert through the network (zero weight
    # rows/cols, zero bias, ReLU(0)=0); padded output cols are sliced off.
    def pad_w(w, r, c):
        return jnp.zeros((r, c), jnp.bfloat16).at[:w.shape[0], :w.shape[1]].set(
            w.astype(jnp.bfloat16))

    def pad_b(b, c):
        return jnp.zeros((1, c), jnp.float32).at[:, :b.shape[1]].set(
            b.astype(jnp.float32))

    w1 = pad_w(params["w1"], io_p, h_p); b1 = pad_b(params["b1"], h_p)
    w2 = pad_w(params["w2"], h_p, h_p);  b2 = pad_b(params["b2"], h_p)
    w3 = pad_w(params["w3"], h_p, io_p); b3 = pad_b(params["b3"], io_p)

    if tb is not None:
        b_pad = _round_up(max(B, 1), tb)
        # Cast x to bf16 wrapper-side (halves the input DMA); skip the pad
        # copy entirely when the shape is already tile-aligned.
        if io_dim == io_p and B == b_pad:
            x_p = x.astype(jnp.bfloat16)
        else:
            x_p = jnp.zeros((b_pad, io_p), jnp.bfloat16).at[:B, :io_dim].set(
                x.astype(jnp.bfloat16))
        out_p = _build_fused_call(b_pad, io_p, h_p, tb, jnp.float32,
                                  usable_vmem)(x_p, w1, b1, w2, b2, w3, b3)
    else:
        # Weights too large to stay resident (e.g. hidden ~ 4k on v7x's
        # 64 MiB VMEM): stream them layer by layer with a K-reduction grid.
        tm = min(256, _round_up(max(B, 1), _SUBLANE))
        b_pad = _round_up(max(B, 1), tm)
        x_p = jnp.zeros((b_pad, io_p), jnp.bfloat16).at[:B, :io_dim].set(
            x.astype(jnp.bfloat16))
        h1 = _linear_pallas(x_p, w1, b1, relu=True, out_dtype=jnp.bfloat16,
                            usable_vmem=usable_vmem)
        h2 = _linear_pallas(h1, w2, b2, relu=True, out_dtype=jnp.bfloat16,
                            usable_vmem=usable_vmem)
        out_p = _linear_pallas(h2, w3, b3, relu=False, out_dtype=jnp.float32,
                               usable_vmem=usable_vmem)

    return out_p[:B, :io_dim].astype(x.dtype)


# ----------------------------------------------------------------------------
# Parameter init + references (mirror PyTorch nn.Linear).
# ----------------------------------------------------------------------------
def init_params(key, io_dim, hidden):
    """Deterministic init mimicking PyTorch nn.Linear (uniform +/-1/sqrt(fan_in))."""
    ks = jax.random.split(key, 6)

    def linear(kw, kb, fan_in, fan_out):
        bound = 1.0 / jnp.sqrt(fan_in)
        w = jax.random.uniform(kw, (fan_in, fan_out), jnp.float32, -bound, bound)
        b = jax.random.uniform(kb, (1, fan_out), jnp.float32, -bound, bound)
        return w, b

    w1, b1 = linear(ks[0], ks[1], io_dim, hidden)
    w2, b2 = linear(ks[2], ks[3], hidden, hidden)
    w3, b3 = linear(ks[4], ks[5], hidden, io_dim)
    return {"w1": w1, "b1": b1, "w2": w2, "b2": b2, "w3": w3, "b3": b3}


def mlp_ref_f32(x, p):
    h1 = jnp.maximum(x @ p["w1"] + p["b1"], 0.0)
    h2 = jnp.maximum(h1 @ p["w2"] + p["b2"], 0.0)
    return h2 @ p["w3"] + p["b3"]


def mlp_ref_bf16(x, p):
    # Matches the kernel's numerics: bf16 operands, f32 accumulation.
    # TODO(synk): bf16 MXU matmuls only match the f32 PyTorch Linear to ~1e-2;
    # use an f32 matmul path if strict parity is required (about 3x slower).
    bf = jnp.bfloat16
    h1 = jnp.dot(x.astype(bf), p["w1"].astype(bf),
                 preferred_element_type=jnp.float32) + p["b1"]
    h1 = jnp.maximum(h1, 0.0)
    h2 = jnp.dot(h1.astype(bf), p["w2"].astype(bf),
                 preferred_element_type=jnp.float32) + p["b2"]
    h2 = jnp.maximum(h2, 0.0)
    return jnp.dot(h2.astype(bf), p["w3"].astype(bf),
                   preferred_element_type=jnp.float32) + p["b3"]


if __name__ == "__main__":
    key = jax.random.PRNGKey(0)
    k_x, k_p = jax.random.split(key)

    batch, io_dim, hidden = 32, 16, 32
    x = jax.random.normal(k_x, (batch, io_dim), jnp.float32)
    params = init_params(k_p, io_dim, hidden)

    out = jax.block_until_ready(unconditioned_simple_mlp(x, params))

    ref_bf16 = mlp_ref_bf16(x, params)
    ref_f32 = mlp_ref_f32(x, params)
    assert out.shape == (batch, io_dim)
    # Tight check against the precision-matched (bf16-MXU) reference.
    assert jnp.allclose(out, ref_bf16, atol=1e-2, rtol=1e-2)
    # Loose sanity check against the pure-f32 reference.
    assert jnp.allclose(out, ref_f32, atol=1e-1, rtol=1e-1)

    print("KERNEL_OK")
</pallas_src>

<mosaic_0001>
module attributes {stable_mosaic.version = 11 : i64} {
  func.func @_fused_mlp_kernel(%arg0: i32, %arg1: memref<32x128xbf16, #tpu.memory_space<vmem>>, %arg2: memref<128x128xbf16, #tpu.memory_space<vmem>>, %arg3: memref<1x128xf32, #tpu.memory_space<vmem>>, %arg4: memref<128x128xbf16, #tpu.memory_space<vmem>>, %arg5: memref<1x128xf32, #tpu.memory_space<vmem>>, %arg6: memref<128x128xbf16, #tpu.memory_space<vmem>>, %arg7: memref<1x128xf32, #tpu.memory_space<vmem>>, %arg8: memref<32x128xf32, #tpu.memory_space<vmem>>) attributes {dimension_semantics = [#tpu.dimension_semantics<parallel>], iteration_bounds = array<i64: 1>, scalar_prefetch = 0 : i64, scratch_operands = 0 : i64, tpu.core_type = #tpu.core_type<tc>, window_params = [{transform_indices = @transform_0, window_bounds = array<i64: 32, 128>}, {pipeline_mode = #tpu.pipeline_mode<synchronous>, transform_indices = @transform_1, window_bounds = array<i64: 128, 128>}, {pipeline_mode = #tpu.pipeline_mode<synchronous>, transform_indices = @transform_2, window_bounds = array<i64: 1, 128>}, {pipeline_mode = #tpu.pipeline_mode<synchronous>, transform_indices = @transform_3, window_bounds = array<i64: 128, 128>}, {pipeline_mode = #tpu.pipeline_mode<synchronous>, transform_indices = @transform_4, window_bounds = array<i64: 1, 128>}, {pipeline_mode = #tpu.pipeline_mode<synchronous>, transform_indices = @transform_5, window_bounds = array<i64: 128, 128>}, {pipeline_mode = #tpu.pipeline_mode<synchronous>, transform_indices = @transform_6, window_bounds = array<i64: 1, 128>}, {transform_indices = @transform_7, window_bounds = array<i64: 32, 128>}]} {
    %c0 = arith.constant 0 : index
    %c0_0 = arith.constant 0 : index
    %0 = vector.load %arg1[%c0, %c0_0] : memref<32x128xbf16, #tpu.memory_space<vmem>>, vector<32x128xbf16>
    %c0_1 = arith.constant 0 : index
    %c0_2 = arith.constant 0 : index
    %1 = vector.load %arg2[%c0_1, %c0_2] : memref<128x128xbf16, #tpu.memory_space<vmem>>, vector<128x128xbf16>
    %cst = arith.constant dense<0.000000e+00> : vector<32x128xf32>
    %2 = tpu.matmul %0, %1, %cst {dimension_numbers = #tpu.dot_dimension_numbers<[1], [0], [0], [1], [0, 0, 1, 1], [], []>} : vector<32x128xbf16>, vector<128x128xbf16>, vector<32x128xf32> -> vector<32x128xf32>
    %c0_3 = arith.constant 0 : index
    %c0_4 = arith.constant 0 : index
    %3 = vector.load %arg3[%c0_3, %c0_4] : memref<1x128xf32, #tpu.memory_space<vmem>>, vector<1x128xf32>
    %4 = vector.broadcast %3 : vector<1x128xf32> to vector<32x128xf32>
    %5 = arith.addf %2, %4 : vector<32x128xf32>
    %cst_5 = arith.constant 0.000000e+00 : f32
    %6 = vector.broadcast %cst_5 : f32 to vector<32x128xf32>
    %7 = arith.maximumf %5, %6 : vector<32x128xf32>
    %8 = arith.truncf %7 : vector<32x128xf32> to vector<32x128xbf16>
    %c0_6 = arith.constant 0 : index
    %c0_7 = arith.constant 0 : index
    %9 = vector.load %arg4[%c0_6, %c0_7] : memref<128x128xbf16, #tpu.memory_space<vmem>>, vector<128x128xbf16>
    %cst_8 = arith.constant dense<0.000000e+00> : vector<32x128xf32>
    %10 = tpu.matmul %8, %9, %cst_8 {dimension_numbers = #tpu.dot_dimension_numbers<[1], [0], [0], [1], [0, 0, 1, 1], [], []>} : vector<32x128xbf16>, vector<128x128xbf16>, vector<32x128xf32> -> vector<32x128xf32>
    %c0_9 = arith.constant 0 : index
    %c0_10 = arith.constant 0 : index
    %11 = vector.load %arg5[%c0_9, %c0_10] : memref<1x128xf32, #tpu.memory_space<vmem>>, vector<1x128xf32>
    %12 = vector.broadcast %11 : vector<1x128xf32> to vector<32x128xf32>
    %13 = arith.addf %10, %12 : vector<32x128xf32>
    %cst_11 = arith.constant 0.000000e+00 : f32
    %14 = vector.broadcast %cst_11 : f32 to vector<32x128xf32>
    %15 = arith.maximumf %13, %14 : vector<32x128xf32>
    %16 = arith.truncf %15 : vector<32x128xf32> to vector<32x128xbf16>
    %c0_12 = arith.constant 0 : index
    %c0_13 = arith.constant 0 : index
    %17 = vector.load %arg6[%c0_12, %c0_13] : memref<128x128xbf16, #tpu.memory_space<vmem>>, vector<128x128xbf16>
    %cst_14 = arith.constant dense<0.000000e+00> : vector<32x128xf32>
    %18 = tpu.matmul %16, %17, %cst_14 {dimension_numbers = #tpu.dot_dimension_numbers<[1], [0], [0], [1], [0, 0, 1, 1], [], []>} : vector<32x128xbf16>, vector<128x128xbf16>, vector<32x128xf32> -> vector<32x128xf32>
    %c0_15 = arith.constant 0 : index
    %c0_16 = arith.constant 0 : index
    %19 = vector.load %arg7[%c0_15, %c0_16] : memref<1x128xf32, #tpu.memory_space<vmem>>, vector<1x128xf32>
    %20 = vector.broadcast %19 : vector<1x128xf32> to vector<32x128xf32>
    %21 = arith.addf %18, %20 : vector<32x128xf32>
    %c0_17 = arith.constant 0 : index
    %c0_18 = arith.constant 0 : index
    %22 = vector.load %arg8[%c0_17, %c0_18] : memref<32x128xf32, #tpu.memory_space<vmem>>, vector<32x128xf32>
    tpu.vector_store %arg8[%c0_17, %c0_18], %21 {strides = array<i32>} : memref<32x128xf32, #tpu.memory_space<vmem>>, vector<32x128xf32>,
    return
  }
  func.func @transform_0(%arg0: i32) -> (i32, i32) {
    %c0_i32 = arith.constant 0 : i32
    %c0_i32_0 = arith.constant 0 : i32
    return %arg0, %c0_i32 : i32, i32
  }
  func.func @transform_1(%arg0: i32) -> (i32, i32) {
    %c0_i32 = arith.constant 0 : i32
    %c0_i32_0 = arith.constant 0 : i32
    %c0_i32_1 = arith.constant 0 : i32
    return %c0_i32, %c0_i32_0 : i32, i32
  }
  func.func @transform_2(%arg0: i32) -> (i32, i32) {
    %c0_i32 = arith.constant 0 : i32
    %c0_i32_0 = arith.constant 0 : i32
    %c0_i32_1 = arith.constant 0 : i32
    return %c0_i32, %c0_i32_0 : i32, i32
  }
  func.func @transform_3(%arg0: i32) -> (i32, i32) {
    %c0_i32 = arith.constant 0 : i32
    %c0_i32_0 = arith.constant 0 : i32
    %c0_i32_1 = arith.constant 0 : i32
    return %c0_i32, %c0_i32_0 : i32, i32
  }
  func.func @transform_4(%arg0: i32) -> (i32, i32) {
    %c0_i32 = arith.constant 0 : i32
    %c0_i32_0 = arith.constant 0 : i32
    %c0_i32_1 = arith.constant 0 : i32
    return %c0_i32, %c0_i32_0 : i32, i32
  }
  func.func @transform_5(%arg0: i32) -> (i32, i32) {
    %c0_i32 = arith.constant 0 : i32
    %c0_i32_0 = arith.constant 0 : i32
    %c0_i32_1 = arith.constant 0 : i32
    return %c0_i32, %c0_i32_0 : i32, i32
  }
  func.func @transform_6(%arg0: i32) -> (i32, i32) {
    %c0_i32 = arith.constant 0 : i32
    %c0_i32_0 = arith.constant 0 : i32
    %c0_i32_1 = arith.constant 0 : i32
    return %c0_i32, %c0_i32_0 : i32, i32
  }
  func.func @transform_7(%arg0: i32) -> (i32, i32) {
    %c0_i32 = arith.constant 0 : i32
    %c0_i32_0 = arith.constant 0 : i32
    return %arg0, %c0_i32 : i32, i32
  }
}

</mosaic_0001>

<llo_original>
// kernel: tpu_custom_call.1
$region0: #{tpu_custom_call.1}
  #allocation0 [shape = 'u32[]', space=smem, size = 0x4, offset = 0x4, fixed_abs, tag = 'smem constant byte address 0x4 - core index']
  #allocation1 [shape = 'u32[144,128]{1,0:T(1,128)}', space=vmem, size = 0x12000, scoped, tag = 'internal scratch']
  %s0 = inlined_call_operand.hbm [shape: bf16[32,128], index: 0, kind: input, shape index: {}]
  %s1 = inlined_call_operand.hbm [shape: bf16[128,128], index: 1, kind: input, shape index: {}]
  %s2 = inlined_call_operand.vmem [shape: f32[1,128], index: 2, kind: input, shape index: {}]
  %s3 = inlined_call_operand.hbm [shape: bf16[128,128], index: 3, kind: input, shape index: {}]
  %s4 = inlined_call_operand.vmem [shape: f32[1,128], index: 4, kind: input, shape index: {}]
  %s5 = inlined_call_operand.hbm [shape: bf16[128,128], index: 5, kind: input, shape index: {}]
  %s6 = inlined_call_operand.vmem [shape: f32[1,128], index: 6, kind: input, shape index: {}]
  %s7 = inlined_call_operand.hbm [shape: f32[32,128], index: 7, kind: output, shape index: {}]
  %s8 = sld [smem:[#allocation0]]
  $region54: #{tpu_custom_call.1} parent=0
    _
  %s10 = ssub.s32 1, %s8
  %s11 = scalar_select 0, %s10, %s8
  $region1: #{tpu_custom_call.1} parent=0
    #allocation2 [shape = 'u8[8192]{0}', space=vmem, size = 0x2000, scoped, tag = 'input window, operand 0, single buffered']
    #allocation3 [shape = 's32[1]{0}', space=sflag, size = 0x4, scoped, tag = 'scoped memory for tpu_custom_call.1']
    #allocation4 [shape = 's32[1]{0}', space=sflag, size = 0x4, scoped, tag = 'scoped memory for tpu_custom_call.1']
    #allocation5 [shape = 'u8[32768]{0}', space=vmem, size = 0x8000, scoped, tag = 'input window, operand 1, single buffered']
    #allocation6 [shape = 's32[1]{0}', space=sflag, size = 0x4, scoped, tag = 'scoped memory for tpu_custom_call.1']
    #allocation7 [shape = 'u8[32768]{0}', space=vmem, size = 0x8000, scoped, tag = 'input window, operand 3, single buffered']
    #allocation8 [shape = 'u8[32768]{0}', space=vmem, size = 0x8000, scoped, tag = 'input window, operand 5, single buffered']
    #allocation9 [shape = 's32[1]{0}', space=sflag, size = 0x4, scoped, tag = 'scoped memory for tpu_custom_call.1']
    #allocation10 [shape = 'u8[16384]{0}', space=vmem, size = 0x4000, scoped, tag = 'output window, operand 0, single buffered']
    %12 = vsyncpa [#allocation3], 0
    %13 = vsyncpa [#allocation6], 0
    %14 = vsyncpa [#allocation9], 0
    %15 = vsyncpa [#allocation4], 0
    // Predicated region
    $region2: #{tpu_custom_call.1} parent=1 // pred_check
      _
    $region3: #{tpu_custom_call.1} parent=1 // pred_check_branch
      %17 = sbr.rel (0) target = $region5
    $region4: #{tpu_custom_call.1} parent=1 // pred_region
      %s19 = ssub.s32 256, 256
      %20 = vsyncadd [#allocation3], %s19
      %s21 = sshll.u32 [#allocation2], 4
      %s22 = int_to_ptr.vmem [resolvable:$true] %s21
      %27 = dma.hbm_to_vmem [thread:$0]  %s0, 256, %s22, [#allocation3], 64, 64, 4
    $region5: #{tpu_custom_call.1} parent=1 // pred_fallthru
      _
    // Predicated region
    $region6: #{tpu_custom_call.1} parent=1 // pred_check
      _
    $region7: #{tpu_custom_call.1} parent=1 // pred_check_branch
      %29 = sbr.rel (0) target = $region9
    $region8: #{tpu_custom_call.1} parent=1 // pred_region
      %s31 = ssub.s32 1024, 1024
      %32 = vsyncadd [#allocation6], %s31
      %s33 = sshll.u32 [#allocation5], 4
      %s34 = int_to_ptr.vmem [resolvable:$true] %s33
      %39 = dma.hbm_to_vmem [thread:$0]  %s1, 1024, %s34, [#allocation6], 64, 64, 4
    $region9: #{tpu_custom_call.1} parent=1 // pred_fallthru
      _
    // Predicated region
    $region10: #{tpu_custom_call.1} parent=1 // pred_check
      _
    $region11: #{tpu_custom_call.1} parent=1 // pred_check_branch
      %41 = sbr.rel (0) target = $region13
    $region12: #{tpu_custom_call.1} parent=1 // pred_region
      _
    $region13: #{tpu_custom_call.1} parent=1 // pred_fallthru
      _
    // Predicated region
    $region14: #{tpu_custom_call.1} parent=1 // pred_check
      _
    $region15: #{tpu_custom_call.1} parent=1 // pred_check_branch
      %43 = sbr.rel (0) target = $region17
    $region16: #{tpu_custom_call.1} parent=1 // pred_region
      %s45 = ssub.s32 1024, 1024
      %46 = vsyncadd [#allocation6], %s45
      %s47 = sshll.u32 [#allocation7], 4
      %s48 = int_to_ptr.vmem [resolvable:$true] %s47
      %53 = dma.hbm_to_vmem [thread:$0]  %s3, 1024, %s48, [#allocation6], 64, 64, 4
    $region17: #{tpu_custom_call.1} parent=1 // pred_fallthru
      _
    // Predicated region
    $region18: #{tpu_custom_call.1} parent=1 // pred_check
      _
    $region19: #{tpu_custom_call.1} parent=1 // pred_check_branch
      %55 = sbr.rel (0) target = $region21
    $region20: #{tpu_custom_call.1} parent=1 // pred_region
      _
    $region21: #{tpu_custom_call.1} parent=1 // pred_fallthru
      _
    // Predicated region
    $region22: #{tpu_custom_call.1} parent=1 // pred_check
      _
    $region23: #{tpu_custom_call.1} parent=1 // pred_check_branch
      %57 = sbr.rel (0) target = $region25
    $region24: #{tpu_custom_call.1} parent=1 // pred_region
      %s59 = ssub.s32 1024, 1024
      %60 = vsyncadd [#allocation9], %s59
      %s61 = sshll.u32 [#allocation8], 4
      %s62 = int_to_ptr.vmem [resolvable:$true] %s61
      %67 = dma.hbm_to_vmem [thread:$0]  %s5, 1024, %s62, [#allocation9], 64, 64, 4
    $region25: #{tpu_custom_call.1} parent=1 // pred_fallthru
      _
    // Predicated region
    $region26: #{tpu_custom_call.1} parent=1 // pred_check
      _
    $region27: #{tpu_custom_call.1} parent=1 // pred_check_branch
      %69 = sbr.rel (0) target = $region29
    $region28: #{tpu_custom_call.1} parent=1 // pred_region
      _
    $region29: #{tpu_custom_call.1} parent=1 // pred_fallthru
      _
    // Predicated region
    $region30: #{tpu_custom_call.1} parent=1 // pred_check
      _
    $region31: #{tpu_custom_call.1} parent=1 // pred_check_branch
      %71 = sbr.rel (0) target = $region33
    $region32: #{tpu_custom_call.1} parent=1 // pred_region
      %72 = dma.done [#allocation3], 256
    $region33: #{tpu_custom_call.1} parent=1 // pred_fallthru
      _
    // Predicated region
    $region34: #{tpu_custom_call.1} parent=1 // pred_check
      _
    $region35: #{tpu_custom_call.1} parent=1 // pred_check_branch
      %74 = sbr.rel (0) target = $region37
    $region36: #{tpu_custom_call.1} parent=1 // pred_region
      %75 = dma.done [#allocation6], 1024
    $region37: #{tpu_custom_call.1} parent=1 // pred_fallthru
      _
    // Predicated region
    $region38: #{tpu_custom_call.1} parent=1 // pred_check
      _
    $region39: #{tpu_custom_call.1} parent=1 // pred_check_branch
      %77 = sbr.rel (0) target = $region41
    $region40: #{tpu_custom_call.1} parent=1 // pred_region
      %78 = dma.done [#allocation6], 1024
    $region41: #{tpu_custom_call.1} parent=1 // pred_fallthru
      _
    // Predicated region
    $region42: #{tpu_custom_call.1} parent=1 // pred_check
      _
    $region43: #{tpu_custom_call.1} parent=1 // pred_check_branch
      %80 = sbr.rel (0) target = $region45
    $region44: #{tpu_custom_call.1} parent=1 // pred_region
      %81 = dma.done [#allocation9], 1024
    $region45: #{tpu_custom_call.1} parent=1 // pred_fallthru
      _
    %v83 = vld [vmem:[#allocation2] sm:$0xf]
    %v84 = vld [vmem:[#allocation2 + $0x4] sm:$0xf]
    %v85 = vld [vmem:[#allocation2 + $0x8] sm:$0xf]
    %v86 = vld [vmem:[#allocation2 + $0xc] sm:$0xf]
    %v87 = vld [vmem:[#allocation5] sm:$0xf]
    %v88 = vld [vmem:[#allocation5 + $0x4] sm:$0xf]
    %v89 = vld [vmem:[#allocation5 + $0x8] sm:$0xf]
    %v90 = vld [vmem:[#allocation5 + $0xc] sm:$0xf]
    %v91 = vld [vmem:[#allocation5 + $0x10] sm:$0xf]
    %v92 = vld [vmem:[#allocation5 + $0x14] sm:$0xf]
    %v93 = vld [vmem:[#allocation5 + $0x18] sm:$0xf]
    %v94 = vld [vmem:[#allocation5 + $0x1c] sm:$0xf]
    %v95 = vld [vmem:[#allocation5 + $0x20] sm:$0xf]
    %v96 = vld [vmem:[#allocation5 + $0x24] sm:$0xf]
    %v97 = vld [vmem:[#allocation5 + $0x28] sm:$0xf]
    %v98 = vld [vmem:[#allocation5 + $0x2c] sm:$0xf]
    %v99 = vld [vmem:[#allocation5 + $0x30] sm:$0xf]
    %v100 = vld [vmem:[#allocation5 + $0x34] sm:$0xf]
    %v101 = vld [vmem:[#allocation5 + $0x38] sm:$0xf]
    %v102 = vld [vmem:[#allocation5 + $0x3c] sm:$0xf]
    %v103 = vld [vmem:[%s2] sm:$0x1]
    %v105 = vlaneseq
    %v106 = vshrl.u32 %v105, 7
    %v107 = vsub.s32 0, %v106
    %v108 = vrot.slane %v103, %v107
    %v114 = vunpack.c.l.b16 %v83
    %v115 = vunpack.c.l.b16 %v84
    %v116 = vunpack.c.l.b16 %v85
    %v117 = vunpack.c.l.b16 %v86
    %v118 = vpack.c.b16 %v115, %v114
    %v119 = vpack.c.b16 %v117, %v116
    %v138 = vunpack.c.l.b16 %v87
    %v139 = vunpack.c.l.b16 %v88
    %v140 = vunpack.c.l.b16 %v89
    %v141 = vunpack.c.l.b16 %v90
    %v142 = vunpack.c.l.b16 %v91
    %v143 = vunpack.c.l.b16 %v92
    %v144 = vunpack.c.l.b16 %v93
    %v145 = vunpack.c.l.b16 %v94
    %v146 = vunpack.c.l.b16 %v95
    %v147 = vunpack.c.l.b16 %v96
    %v148 = vunpack.c.l.b16 %v97
    %v149 = vunpack.c.l.b16 %v98
    %v150 = vunpack.c.l.b16 %v99
    %v151 = vunpack.c.l.b16 %v100
    %v152 = vunpack.c.l.b16 %v101
    %v153 = vunpack.c.l.b16 %v102
    %v154 = vpack.c.b16 %v139, %v138
    %v155 = vpack.c.b16 %v141, %v140
    %v156 = vpack.c.b16 %v143, %v142
    %v157 = vpack.c.b16 %v145, %v144
    %v158 = vpack.c.b16 %v147, %v146
    %v159 = vpack.c.b16 %v149, %v148
    %v160 = vpack.c.b16 %v151, %v150
    %v161 = vpack.c.b16 %v153, %v152
    %170 = vmatprep.subr.bf16.mxu0 0
    %171 = vmatpush1.bf16.msra.mxu0 %v161
    %172 = vmatprep.subr.bf16.mxu0 0
    %173 = vmatpush1.bf16.msra.mxu0 %v160
    %174 = vmatprep.subr.bf16.mxu0 0
    %175 = vmatpush1.bf16.msra.mxu0 %v159
    %176 = vmatprep.subr.bf16.mxu0 0
    %177 = vmatpush1.bf16.msra.mxu0 %v158
    %178 = vmatprep.subr.bf16.mxu0 0
    %179 = vmatpush1.bf16.msra.mxu0 %v157
    %180 = vmatprep.subr.bf16.mxu0 0
    %181 = vmatpush1.bf16.msra.mxu0 %v156
    %182 = vmatprep.subr.bf16.mxu0 0
    %183 = vmatpush1.bf16.msra.mxu0 %v155
    %184 = vmatprep.subr.bf16.mxu0 0
    %185 = vmatpush1.bf16.msra.mxu0 %v154
    %186 = vmatprep.subr.bf16.mxu0 0
    %187 = vmatpush2.bf16.msra.mxu0 0
    %188 = vmatprep.subr.bf16.mxu0 0
    %189 = vmatpush2.bf16.msra.mxu0 0
    %190 = vmatprep.subr.bf16.mxu0 0
    %191 = vmatpush2.bf16.msra.mxu0 0
    %192 = vmatprep.subr.bf16.mxu0 0
    %193 = vmatpush2.bf16.msra.mxu0 0
    %194 = vmatprep.subr.bf16.mxu0 0
    %195 = vmatpush2.bf16.msra.mxu0 0
    %196 = vmatprep.subr.bf16.mxu0 0
    %197 = vmatpush2.bf16.msra.mxu0 0
    %198 = vmatprep.subr.bf16.mxu0 0
    %199 = vmatpush2.bf16.msra.mxu0 0
    %200 = vmatprep.subr.bf16.mxu0 0
    %201 = vmatpush2.bf16.msra.mxu0 0
    %202 = vmatprep.mubr.bf16.mxu0 0
    %203 = vmatmul.mubr.bf16.gmra.mxu0 %v118
    %v204 = vpop.f32.mrf.mxu0
    %v205 = vadd.f32 %v108, %v204
    %v206 = vpop.f32.mrf.mxu0
    %v207 = vpop.f32.mrf.mxu0
    %v208 = vadd.f32 %v108, %v207
    %v209 = vpop.f32.mrf.mxu0
    %210 = vmatprep.mubr.bf16.mxu0 0
    %211 = vmatmul.mubr.bf16.gmra.mxu0 %v119
    %v212 = vpop.f32.mrf.mxu0
    %v213 = vadd.f32 %v108, %v212
    %v214 = vpop.f32.mrf.mxu0
    %v215 = vpop.f32.mrf.mxu0
    %v216 = vadd.f32 %v108, %v215
    %v217 = vpop.f32.mrf.mxu0
    %218 = vdwg.mxu0
    %v219 = vmax.f32 %v205, 0.0
    %v220 = vmax.f32 %v208, 0.0
    %v221 = vmax.f32 %v213, 0.0
    %v222 = vmax.f32 %v216, 0.0
    %v223 = vpack.c.bf16 %v220, %v219
    %v224 = vpack.c.bf16 %v222, %v221
    %v225 = vld [vmem:[#allocation7] sm:$0xf]
    %v226 = vld [vmem:[#allocation7 + $0x4] sm:$0xf]
    %v227 = vld [vmem:[#allocation7 + $0x8] sm:$0xf]
    %v228 = vld [vmem:[#allocation7 + $0xc] sm:$0xf]
    %v229 = vld [vmem:[#allocation7 + $0x10] sm:$0xf]
    %v230 = vld [vmem:[#allocation7 + $0x14] sm:$0xf]
    %v231 = vld [vmem:[#allocation7 + $0x18] sm:$0xf]
    %v232 = vld [vmem:[#allocation7 + $0x1c] sm:$0xf]
    %v233 = vld [vmem:[#allocation7 + $0x20] sm:$0xf]
    %v234 = vld [vmem:[#allocation7 + $0x24] sm:$0xf]
    %v235 = vld [vmem:[#allocation7 + $0x28] sm:$0xf]
    %v236 = vld [vmem:[#allocation7 + $0x2c] sm:$0xf]
    %v237 = vld [vmem:[#allocation7 + $0x30] sm:$0xf]
    %v238 = vld [vmem:[#allocation7 + $0x34] sm:$0xf]
    %v239 = vld [vmem:[#allocation7 + $0x38] sm:$0xf]
    %v240 = vld [vmem:[#allocation7 + $0x3c] sm:$0xf]
    %v241 = vld [vmem:[%s4] sm:$0x1]
    %v243 = vlaneseq
    %v244 = vshrl.u32 %v243, 7
    %v245 = vsub.s32 0, %v244
    %v246 = vrot.slane %v241, %v245
    %v264 = vunpack.c.l.b16 %v225
    %v265 = vunpack.c.l.b16 %v226
    %v266 = vunpack.c.l.b16 %v227
    %v267 = vunpack.c.l.b16 %v228
    %v268 = vunpack.c.l.b16 %v229
    %v269 = vunpack.c.l.b16 %v230
    %v270 = vunpack.c.l.b16 %v231
    %v271 = vunpack.c.l.b16 %v232
    %v272 = vunpack.c.l.b16 %v233
    %v273 = vunpack.c.l.b16 %v234
    %v274 = vunpack.c.l.b16 %v235
    %v275 = vunpack.c.l.b16 %v236
    %v276 = vunpack.c.l.b16 %v237
    %v277 = vunpack.c.l.b16 %v238
    %v278 = vunpack.c.l.b16 %v239
    %v279 = vunpack.c.l.b16 %v240
    %v280 = vpack.c.b16 %v265, %v264
    %v281 = vpack.c.b16 %v267, %v266
    %v282 = vpack.c.b16 %v269, %v268
    %v283 = vpack.c.b16 %v271, %v270
    %v284 = vpack.c.b16 %v273, %v272
    %v285 = vpack.c.b16 %v275, %v274
    %v286 = vpack.c.b16 %v277, %v276
    %v287 = vpack.c.b16 %v279, %v278
    %296 = vmatprep.subr.bf16.mxu0 0
    %297 = vmatpush1.bf16.msra.mxu0 %v287
    %298 = vmatprep.subr.bf16.mxu0 0
    %299 = vmatpush1.bf16.msra.mxu0 %v286
    %300 = vmatprep.subr.bf16.mxu0 0
    %301 = vmatpush1.bf16.msra.mxu0 %v285
    %302 = vmatprep.subr.bf16.mxu0 0
    %303 = vmatpush1.bf16.msra.mxu0 %v284
    %304 = vmatprep.subr.bf16.mxu0 0
    %305 = vmatpush1.bf16.msra.mxu0 %v283
    %306 = vmatprep.subr.bf16.mxu0 0
    %307 = vmatpush1.bf16.msra.mxu0 %v282
    %308 = vmatprep.subr.bf16.mxu0 0
    %309 = vmatpush1.bf16.msra.mxu0 %v281
    %310 = vmatprep.subr.bf16.mxu0 0
    %311 = vmatpush1.bf16.msra.mxu0 %v280
    %312 = vmatprep.subr.bf16.mxu0 0
    %313 = vmatpush2.bf16.msra.mxu0 0
    %314 = vmatprep.subr.bf16.mxu0 0
    %315 = vmatpush2.bf16.msra.mxu0 0
    %316 = vmatprep.subr.bf16.mxu0 0
    %317 = vmatpush2.bf16.msra.mxu0 0
    %318 = vmatprep.subr.bf16.mxu0 0
    %319 = vmatpush2.bf16.msra.mxu0 0
    %320 = vmatprep.subr.bf16.mxu0 0
    %321 = vmatpush2.bf16.msra.mxu0 0
    %322 = vmatprep.subr.bf16.mxu0 0
    %323 = vmatpush2.bf16.msra.mxu0 0
    %324 = vmatprep.subr.bf16.mxu0 0
    %325 = vmatpush2.bf16.msra.mxu0 0
    %326 = vmatprep.subr.bf16.mxu0 0
    %327 = vmatpush2.bf16.msra.mxu0 0
    %328 = vmatprep.mubr.bf16.mxu0 0
    %329 = vmatmul.mubr.bf16.gmra.mxu0 %v223
    %v330 = vpop.f32.mrf.mxu0
    %v331 = vadd.f32 %v246, %v330
    %v332 = vpop.f32.mrf.mxu0
    %v333 = vpop.f32.mrf.mxu0
    %v334 = vadd.f32 %v246, %v333
    %v335 = vpop.f32.mrf.mxu0
    %336 = vmatprep.mubr.bf16.mxu0 0
    %337 = vmatmul.mubr.bf16.gmra.mxu0 %v224
    %v338 = vpop.f32.mrf.mxu0
    %v339 = vadd.f32 %v246, %v338
    %v340 = vpop.f32.mrf.mxu0
    %v341 = vpop.f32.mrf.mxu0
    %v342 = vadd.f32 %v246, %v341
    %v343 = vpop.f32.mrf.mxu0
    %344 = vdwg.mxu0
    %v345 = vmax.f32 %v331, 0.0
    %v346 = vmax.f32 %v334, 0.0
    %v347 = vmax.f32 %v339, 0.0
    %v348 = vmax.f32 %v342, 0.0
    %v349 = vpack.c.bf16 %v346, %v345
    %v350 = vpack.c.bf16 %v348, %v347
    %v351 = vld [vmem:[#allocation8] sm:$0xf]
    %v352 = vld [vmem:[#allocation8 + $0x4] sm:$0xf]
    %v353 = vld [vmem:[#allocation8 + $0x8] sm:$0xf]
    %v354 = vld [vmem:[#allocation8 + $0xc] sm:$0xf]
    %v355 = vld [vmem:[#allocation8 + $0x10] sm:$0xf]
    %v356 = vld [vmem:[#allocation8 + $0x14] sm:$0xf]
    %v357 = vld [vmem:[#allocation8 + $0x18] sm:$0xf]
    %v358 = vld [vmem:[#allocation8 + $0x1c] sm:$0xf]
    %v359 = vld [vmem:[#allocation8 + $0x20] sm:$0xf]
    %v360 = vld [vmem:[#allocation8 + $0x24] sm:$0xf]
    %v361 = vld [vmem:[#allocation8 + $0x28] sm:$0xf]
    %v362 = vld [vmem:[#allocation8 + $0x2c] sm:$0xf]
    %v363 = vld [vmem:[#allocation8 + $0x30] sm:$0xf]
    %v364 = vld [vmem:[#allocation8 + $0x34] sm:$0xf]
    %v365 = vld [vmem:[#allocation8 + $0x38] sm:$0xf]
    %v366 = vld [vmem:[#allocation8 + $0x3c] sm:$0xf]
    %v367 = vld [vmem:[%s6] sm:$0x1]
    %v369 = vlaneseq
    %v370 = vshrl.u32 %v369, 7
    %v371 = vsub.s32 0, %v370
    %v372 = vrot.slane %v367, %v371
    %v390 = vunpack.c.l.b16 %v351
    %v391 = vunpack.c.l.b16 %v352
    %v392 = vunpack.c.l.b16 %v353
    %v393 = vunpack.c.l.b16 %v354
    %v394 = vunpack.c.l.b16 %v355
    %v395 = vunpack.c.l.b16 %v356
    %v396 = vunpack.c.l.b16 %v357
    %v397 = vunpack.c.l.b16 %v358
    %v398 = vunpack.c.l.b16 %v359
    %v399 = vunpack.c.l.b16 %v360
    %v400 = vunpack.c.l.b16 %v361
    %v401 = vunpack.c.l.b16 %v362
    %v402 = vunpack.c.l.b16 %v363
    %v403 = vunpack.c.l.b16 %v364
    %v404 = vunpack.c.l.b16 %v365
    %v405 = vunpack.c.l.b16 %v366
    %v406 = vpack.c.b16 %v391, %v390
    %v407 = vpack.c.b16 %v393, %v392
    %v408 = vpack.c.b16 %v395, %v394
    %v409 = vpack.c.b16 %v397, %v396
    %v410 = vpack.c.b16 %v399, %v398
    %v411 = vpack.c.b16 %v401, %v400
    %v412 = vpack.c.b16 %v403, %v402
    %v413 = vpack.c.b16 %v405, %v404
    %422 = vmatprep.subr.bf16.mxu0 0
    %423 = vmatpush1.bf16.msra.mxu0 %v413
    %424 = vmatprep.subr.bf16.mxu0 0
    %425 = vmatpush1.bf16.msra.mxu0 %v412
    %426 = vmatprep.subr.bf16.mxu0 0
    %427 = vmatpush1.bf16.msra.mxu0 %v411
    %428 = vmatprep.subr.bf16.mxu0 0
    %429 = vmatpush1.bf16.msra.mxu0 %v410
    %430 = vmatprep.subr.bf16.mxu0 0
    %431 = vmatpush1.bf16.msra.mxu0 %v409
    %432 = vmatprep.subr.bf16.mxu0 0
    %433 = vmatpush1.bf16.msra.mxu0 %v408
    %434 = vmatprep.subr.bf16.mxu0 0
    %435 = vmatpush1.bf16.msra.mxu0 %v407
    %436 = vmatprep.subr.bf16.mxu0 0
    %437 = vmatpush1.bf16.msra.mxu0 %v406
    %438 = vmatprep.subr.bf16.mxu0 0
    %439 = vmatpush2.bf16.msra.mxu0 0
    %440 = vmatprep.subr.bf16.mxu0 0
    %441 = vmatpush2.bf16.msra.mxu0 0
    %442 = vmatprep.subr.bf16.mxu0 0
    %443 = vmatpush2.bf16.msra.mxu0 0
    %444 = vmatprep.subr.bf16.mxu0 0
    %445 = vmatpush2.bf16.msra.mxu0 0
    %446 = vmatprep.subr.bf16.mxu0 0
    %447 = vmatpush2.bf16.msra.mxu0 0
    %448 = vmatprep.subr.bf16.mxu0 0
    %449 = vmatpush2.bf16.msra.mxu0 0
    %450 = vmatprep.subr.bf16.mxu0 0
    %451 = vmatpush2.bf16.msra.mxu0 0
    %452 = vmatprep.subr.bf16.mxu0 0
    %453 = vmatpush2.bf16.msra.mxu0 0
    %454 = vmatprep.mubr.bf16.mxu0 0
    %455 = vmatmul.mubr.bf16.gmra.mxu0 %v349
    %v456 = vpop.f32.mrf.mxu0
    %v457 = vadd.f32 %v372, %v456
    %v458 = vpop.f32.mrf.mxu0
    %v459 = vpop.f32.mrf.mxu0
    %v460 = vadd.f32 %v372, %v459
    %v461 = vpop.f32.mrf.mxu0
    %462 = vmatprep.mubr.bf16.mxu0 0
    %463 = vmatmul.mubr.bf16.gmra.mxu0 %v350
    %v464 = vpop.f32.mrf.mxu0
    %v465 = vadd.f32 %v372, %v464
    %v466 = vpop.f32.mrf.mxu0
    %v467 = vpop.f32.mrf.mxu0
    %v468 = vadd.f32 %v372, %v467
    %v469 = vpop.f32.mrf.mxu0
    %470 = vdwg.mxu0
    %471 = vst [vmem:[#allocation10] sm:$0xff] %v457
    %472 = vst [vmem:[#allocation10 + $0x8] sm:$0xff] %v460
    %473 = vst [vmem:[#allocation10 + $0x10] sm:$0xff] %v465
    %474 = vst [vmem:[#allocation10 + $0x18] sm:$0xff] %v468
    // Predicated region
    $region46: #{tpu_custom_call.1} parent=1 // pred_check
      _
    $region47: #{tpu_custom_call.1} parent=1 // pred_check_branch
      %476 = sbr.rel (0) target = $region49
    $region48: #{tpu_custom_call.1} parent=1 // pred_region
      %s478 = ssub.s32 512, 512
      %479 = vsyncadd [#allocation4], %s478
      %s480 = sshll.u32 [#allocation10], 4
      %s481 = int_to_ptr.vmem [resolvable:$true] %s480
      %486 = dma.vmem_to_hbm [thread:$0]  %s481, 512, %s7, [#allocation4], 128, 128, 8
    $region49: #{tpu_custom_call.1} parent=1 // pred_fallthru
      _
    // Predicated region
    $region50: #{tpu_custom_call.1} parent=1 // pred_check
      _
    $region51: #{tpu_custom_call.1} parent=1 // pred_check_branch
      %488 = sbr.rel (0) target = $region53
    $region52: #{tpu_custom_call.1} parent=1 // pred_region
      %489 = dma.done [#allocation4], 512
    $region53: #{tpu_custom_call.1} parent=1 // pred_fallthru
      _
    %490 = vsyncpa [#allocation3], 1
    %491 = vsyncpa [#allocation6], 1
    %492 = vsyncpa [#allocation9], 1
    %493 = vsyncpa [#allocation4], 1

</llo_original>
